<compile_context>
chip_gen: v5e
topology: v5e:2x2
jax: 0.10.0
libtpu: 0.0.40
codegen_flags: <defaults>
</compile_context>

<pallas_src>
import jax
import jax.numpy as jnp
from jax.experimental import pallas as pl
from jax.experimental.pallas import tpu as pltpu


def _round_up(x, m):
    return ((x + m - 1) // m) * m


def fpmc_forward_kernel(vui_ref, viu_ref, vil_ref, vli_ref, inv_len_ref, out_ref):
    # Blocks: (Bt, F), (Bt, F), (Bt, F), (Bt, L, F), (Bt, 1) -> (Bt, 1)
    vui = vui_ref[...].astype(jnp.float32)       # (Bt, F)
    viu = viu_ref[...].astype(jnp.float32)       # (Bt, F)
    vil = vil_ref[...].astype(jnp.float32)       # (Bt, F)
    vli = vli_ref[...].astype(jnp.float32)       # (Bt, L, F)
    inv_len = inv_len_ref[...]                   # (Bt, 1) float32

    # Sum over L first (sublane reduce) -> L-times fewer multiplies than the
    # bmm-style broadcast, and no (Bt, L, F) f32 intermediate.
    s = jnp.sum(vli, axis=1)                     # (Bt, F)

    # Single fused lane reduce: term1 + term2.
    fused = vui * viu + (s * vil) * inv_len      # (Bt, F)
    out_ref[...] = jnp.sum(fused, axis=1, keepdims=True)  # (Bt, 1)


def fpmc_forward(params, user, item, item_seq, seq_len, *, b_tile=None):
    """Forward pass of FPMC.

    user: (B,) int32, item: (B,) int32, item_seq: (B, L) int32,
    seq_len: (B,) float (lengths >= 1). Returns (B,) float32.
    """
    embed_UI, embed_IU, embed_LI, embed_IL = params

    # Embedding gathers (glue, plain JAX); reductions run inside the kernel.
    VUI = jnp.take(embed_UI, user, axis=0)       # (B, F)
    VIU = jnp.take(embed_IU, item, axis=0)       # (B, F)
    VIL = jnp.take(embed_IL, item, axis=0)       # (B, F)
    VLI = jnp.take(embed_LI, item_seq, axis=0)   # (B, L, F)
    # TODO(synk): fuse the embed_LI gather + sum-over-L into the kernel
    # (scalar-prefetched item_seq + manual DMA from HBM) to avoid the HBM
    # round-trip of the (B, L, F) tensor.

    B, L = item_seq.shape
    F = embed_UI.shape[1]

    # Precompute the reciprocal once in the wrapper (no in-kernel divide).
    inv_len = (1.0 / seq_len.astype(jnp.float32)).reshape(B, 1)

    if b_tile is None:
        # Double-buffered per-step footprint ~= 2 * b_tile * (L + 3) * F * itemsize.
        # Keep it under ~8 MiB so it fits the scoped VMEM limit on v5e/v6e/v7x.
        itemsize = jnp.dtype(VLI.dtype).itemsize
        budget = 8 * 1024 * 1024
        cap = max(8, budget // max(1, 2 * (L + 3) * F * itemsize))
        b_tile = min(max(8, (cap // 8) * 8), _round_up(B, 8), 512)
        b_tile = max(8, (b_tile // 8) * 8)

    # Pad batch to a multiple of the tile (rows are independent, padded rows
    # produce garbage that is sliced off; inv_len pads with 0 -> finite).
    Bp = _round_up(B, b_tile)
    if Bp != B:
        pad = Bp - B
        VUI = jnp.pad(VUI, ((0, pad), (0, 0)))
        VIU = jnp.pad(VIU, ((0, pad), (0, 0)))
        VIL = jnp.pad(VIL, ((0, pad), (0, 0)))
        VLI = jnp.pad(VLI, ((0, pad), (0, 0), (0, 0)))
        inv_len = jnp.pad(inv_len, ((0, pad), (0, 0)))

    vec_spec = pl.BlockSpec((b_tile, F), lambda i: (i, 0))

    out = pl.pallas_call(
        fpmc_forward_kernel,
        out_shape=jax.ShapeDtypeStruct((Bp, 1), jnp.float32),
        grid=(Bp // b_tile,),
        in_specs=[
            vec_spec,                                           # VUI
            vec_spec,                                           # VIU
            vec_spec,                                           # VIL
            pl.BlockSpec((b_tile, L, F), lambda i: (i, 0, 0)),  # VLI
            pl.BlockSpec((b_tile, 1), lambda i: (i, 0)),        # inv_len
        ],
        out_specs=pl.BlockSpec((b_tile, 1), lambda i: (i, 0)),
        compiler_params=pltpu.CompilerParams(
            dimension_semantics=("parallel",),
        ),
    )(VUI, VIU, VIL, VLI, inv_len)

    return out[:B, 0]   # (B,)


def init_fpmc_params(key, user_num, item_num, factor_num):
    k1, k2, k3, k4 = jax.random.split(key, 4)
    embed_UI = 0.01 * jax.random.normal(k1, (user_num, factor_num), jnp.float32)
    embed_IU = 0.01 * jax.random.normal(k2, (item_num, factor_num), jnp.float32)
    embed_LI = 0.01 * jax.random.normal(k3, (item_num + 1, factor_num), jnp.float32)
    # padding_idx=0 -> row 0 is all zeros
    embed_LI = embed_LI.at[0].set(0.0)
    embed_IL = 0.01 * jax.random.normal(k4, (item_num, factor_num), jnp.float32)
    return embed_UI, embed_IU, embed_LI, embed_IL


def fpmc_forward_ref(params, user, item, item_seq, seq_len):
    """Pure-JAX reference (mirrors the PyTorch forward)."""
    embed_UI, embed_IU, embed_LI, embed_IL = params
    VUI = embed_UI[user]
    VIU = embed_IU[item]
    VLI = embed_LI[item_seq]
    VIL = embed_IL[item]
    t1 = jnp.sum(VUI * VIU, axis=1)
    t2 = jnp.sum(jnp.einsum("blf,bf->bl", VLI, VIL), axis=1) / seq_len
    return t1 + t2


if __name__ == "__main__":
    key = jax.random.PRNGKey(0)
    user_num, item_num, factor_num = 16, 24, 32
    B, L = 4, 8

    pkey, ukey, ikey, skey, lkey = jax.random.split(key, 5)
    params = init_fpmc_params(pkey, user_num, item_num, factor_num)

    user = jax.random.randint(ukey, (B,), 0, user_num, dtype=jnp.int32)
    item = jax.random.randint(ikey, (B,), 0, item_num, dtype=jnp.int32)
    # item_seq indices in [0, item_num]; 0 is the padding index
    item_seq = jax.random.randint(skey, (B, L), 0, item_num + 1, dtype=jnp.int32)
    seq_len = jax.random.randint(lkey, (B,), 1, L + 1).astype(jnp.float32)

    out = fpmc_forward(params, user, item, item_seq, seq_len)
    out = jax.block_until_ready(out)

    ref = fpmc_forward_ref(params, user, item, item_seq, seq_len)
    assert out.shape == (B,)
    assert jnp.allclose(out, ref, atol=1e-5, rtol=1e-5), (out, ref)

    print("KERNEL_OK")
</pallas_src>

<mosaic_0001>
module attributes {stable_mosaic.version = 11 : i64} {
  func.func @fpmc_forward_kernel(%arg0: i32, %arg1: memref<8x32xf32, #tpu.memory_space<vmem>>, %arg2: memref<8x32xf32, #tpu.memory_space<vmem>>, %arg3: memref<8x32xf32, #tpu.memory_space<vmem>>, %arg4: memref<8x8x32xf32, #tpu.memory_space<vmem>>, %arg5: memref<8x1xf32, #tpu.memory_space<vmem>>, %arg6: memref<8x1xf32, #tpu.memory_space<vmem>>) attributes {dimension_semantics = [#tpu.dimension_semantics<parallel>], iteration_bounds = array<i64: 1>, scalar_prefetch = 0 : i64, scratch_operands = 0 : i64, tpu.core_type = #tpu.core_type<tc>, window_params = [{transform_indices = @transform_0, window_bounds = array<i64: 8, 32>}, {transform_indices = @transform_1, window_bounds = array<i64: 8, 32>}, {transform_indices = @transform_2, window_bounds = array<i64: 8, 32>}, {transform_indices = @transform_3, window_bounds = array<i64: 8, 8, 32>}, {transform_indices = @transform_4, window_bounds = array<i64: 8, 1>}, {transform_indices = @transform_5, window_bounds = array<i64: 8, 1>}]} {
    %c0 = arith.constant 0 : index
    %c0_0 = arith.constant 0 : index
    %0 = vector.load %arg1[%c0, %c0_0] : memref<8x32xf32, #tpu.memory_space<vmem>>, vector<8x32xf32>
    %c0_1 = arith.constant 0 : index
    %c0_2 = arith.constant 0 : index
    %1 = vector.load %arg2[%c0_1, %c0_2] : memref<8x32xf32, #tpu.memory_space<vmem>>, vector<8x32xf32>
    %c0_3 = arith.constant 0 : index
    %c0_4 = arith.constant 0 : index
    %2 = vector.load %arg3[%c0_3, %c0_4] : memref<8x32xf32, #tpu.memory_space<vmem>>, vector<8x32xf32>
    %c0_5 = arith.constant 0 : index
    %c0_6 = arith.constant 0 : index
    %c0_7 = arith.constant 0 : index
    %3 = vector.load %arg4[%c0_5, %c0_6, %c0_7] : memref<8x8x32xf32, #tpu.memory_space<vmem>>, vector<8x8x32xf32>
    %c0_8 = arith.constant 0 : index
    %c0_9 = arith.constant 0 : index
    %4 = vector.load %arg5[%c0_8, %c0_9] : memref<8x1xf32, #tpu.memory_space<vmem>>, vector<8x1xf32>
    %cst = arith.constant dense<0.000000e+00> : vector<8x32xf32>
    %5 = vector.multi_reduction <add>, %3, %cst [1] : vector<8x8x32xf32> to vector<8x32xf32>
    %6 = arith.mulf %0, %1 : vector<8x32xf32>
    %7 = arith.mulf %5, %2 : vector<8x32xf32>
    %8 = vector.broadcast %4 : vector<8x1xf32> to vector<8x32xf32>
    %9 = arith.mulf %7, %8 : vector<8x32xf32>
    %10 = arith.addf %6, %9 : vector<8x32xf32>
    %cst_10 = arith.constant dense<0.000000e+00> : vector<8xf32>
    %11 = vector.multi_reduction <add>, %10, %cst_10 [1] : vector<8x32xf32> to vector<8xf32>
    %12 = vector.shape_cast %11 : vector<8xf32> to vector<8x1xf32>
    %c0_11 = arith.constant 0 : index
    %c0_12 = arith.constant 0 : index
    %13 = vector.load %arg6[%c0_11, %c0_12] : memref<8x1xf32, #tpu.memory_space<vmem>>, vector<8x1xf32>
    tpu.vector_store %arg6[%c0_11, %c0_12], %12 {strides = array<i32>} : memref<8x1xf32, #tpu.memory_space<vmem>>, vector<8x1xf32>,
    return
  }
  func.func @transform_0(%arg0: i32) -> (i32, i32) {
    %c0_i32 = arith.constant 0 : i32
    %c0_i32_0 = arith.constant 0 : i32
    return %arg0, %c0_i32 : i32, i32
  }
  func.func @transform_1(%arg0: i32) -> (i32, i32) {
    %c0_i32 = arith.constant 0 : i32
    %c0_i32_0 = arith.constant 0 : i32
    return %arg0, %c0_i32 : i32, i32
  }
  func.func @transform_2(%arg0: i32) -> (i32, i32) {
    %c0_i32 = arith.constant 0 : i32
    %c0_i32_0 = arith.constant 0 : i32
    return %arg0, %c0_i32 : i32, i32
  }
  func.func @transform_3(%arg0: i32) -> (i32, i32, i32) {
    %c0_i32 = arith.constant 0 : i32
    %c0_i32_0 = arith.constant 0 : i32
    %c0_i32_1 = arith.constant 0 : i32
    return %arg0, %c0_i32, %c0_i32_0 : i32, i32, i32
  }
  func.func @transform_4(%arg0: i32) -> (i32, i32) {
    %c0_i32 = arith.constant 0 : i32
    %c0_i32_0 = arith.constant 0 : i32
    return %arg0, %c0_i32 : i32, i32
  }
  func.func @transform_5(%arg0: i32) -> (i32, i32) {
    %c0_i32 = arith.constant 0 : i32
    %c0_i32_0 = arith.constant 0 : i32
    return %arg0, %c0_i32 : i32, i32
  }
}

</mosaic_0001>

<llo_original>
// kernel: tpu_custom_call.1
$region0: #{tpu_custom_call.1}
  #allocation0 [shape = 'u32[]', space=smem, size = 0x4, offset = 0x4, fixed_abs, tag = 'smem constant byte address 0x4 - core index']
  #allocation1 [shape = 'u32[72,128]{1,0:T(1,128)}', space=vmem, size = 0x9000, scoped, tag = 'internal scratch']
  %s0 = inlined_call_operand.vmem [shape: f32[8,32], index: 0, kind: input, shape index: {}]
  %s1 = inlined_call_operand.hbm [shape: f32[8,32], index: 1, kind: input, shape index: {}]
  %s2 = inlined_call_operand.hbm [shape: f32[8,32], index: 2, kind: input, shape index: {}]
  %s3 = inlined_call_operand.hbm [shape: f32[8,8,32], index: 3, kind: input, shape index: {}]
  %s4 = inlined_call_operand.vmem [shape: f32[8,1], index: 4, kind: input, shape index: {}]
  %s5 = inlined_call_operand.vmem [shape: f32[8,1], index: 5, kind: output, shape index: {}]
  %s6 = sld [smem:[#allocation0]]
  $region42: #{tpu_custom_call.1} parent=0
    _
  %s8 = ssub.s32 1, %s6
  %s9 = scalar_select 0, %s8, %s6
  $region1: #{tpu_custom_call.1} parent=0
    #allocation2 [shape = 'u8[4096]{0}', space=vmem, size = 0x1000, scoped, tag = 'input window, operand 1, single buffered']
    #allocation3 [shape = 's32[1]{0}', space=sflag, size = 0x4, scoped, tag = 'scoped memory for tpu_custom_call.1']
    #allocation4 [shape = 'u8[4096]{0}', space=vmem, size = 0x1000, scoped, tag = 'input window, operand 2, single buffered']
    #allocation5 [shape = 's32[1]{0}', space=sflag, size = 0x4, scoped, tag = 'scoped memory for tpu_custom_call.1']
    #allocation6 [shape = 'u8[32768]{0}', space=vmem, size = 0x8000, scoped, tag = 'input window, operand 3, single buffered']
    %10 = vsyncpa [#allocation3], 0
    %11 = vsyncpa [#allocation5], 0
    // Predicated region
    $region2: #{tpu_custom_call.1} parent=1 // pred_check
      _
    $region3: #{tpu_custom_call.1} parent=1 // pred_check_branch
      %13 = sbr.rel (0) target = $region5
    $region4: #{tpu_custom_call.1} parent=1 // pred_region
      _
    $region5: #{tpu_custom_call.1} parent=1 // pred_fallthru
      _
    // Predicated region
    $region6: #{tpu_custom_call.1} parent=1 // pred_check
      _
    $region7: #{tpu_custom_call.1} parent=1 // pred_check_branch
      %15 = sbr.rel (0) target = $region9
    $region8: #{tpu_custom_call.1} parent=1 // pred_region
      %17 = vsyncadd [#allocation3], 0
      %s19 = sshll.u32 %s1, 4
      %s20 = int_to_ptr.hbm [resolvable:$true] %s19
      %s21 = sshll.u32 [#allocation2], 4
      %s22 = int_to_ptr.vmem [resolvable:$true] %s21
      %24 = dma.hbm_to_vmem [thread:$0]  %s20, 128, %s22, [#allocation3]
    $region9: #{tpu_custom_call.1} parent=1 // pred_fallthru
      _
    // Predicated region
    $region10: #{tpu_custom_call.1} parent=1 // pred_check
      _
    $region11: #{tpu_custom_call.1} parent=1 // pred_check_branch
      %26 = sbr.rel (0) target = $region13
    $region12: #{tpu_custom_call.1} parent=1 // pred_region
      %28 = vsyncadd [#allocation5], 0
      %s30 = sshll.u32 %s2, 4
      %s31 = int_to_ptr.hbm [resolvable:$true] %s30
      %s32 = sshll.u32 [#allocation4], 4
      %s33 = int_to_ptr.vmem [resolvable:$true] %s32
      %35 = dma.hbm_to_vmem [thread:$0]  %s31, 128, %s33, [#allocation5]
    $region13: #{tpu_custom_call.1} parent=1 // pred_fallthru
      _
    // Predicated region
    $region14: #{tpu_custom_call.1} parent=1 // pred_check
      _
    $region15: #{tpu_custom_call.1} parent=1 // pred_check_branch
      %37 = sbr.rel (0) target = $region17
    $region16: #{tpu_custom_call.1} parent=1 // pred_region
      %39 = vsyncadd [#allocation5], 0
      %s40 = sshll.u32 %s3, 4
      %s41 = int_to_ptr.hbm [resolvable:$true] %s40
      %s42 = sshll.u32 [#allocation6], 4
      %s43 = int_to_ptr.vmem [resolvable:$true] %s42
      %48 = dma.hbm_to_vmem [thread:$0]  %s41, 1024, %s43, [#allocation5], 128, 128, 8
    $region17: #{tpu_custom_call.1} parent=1 // pred_fallthru
      _
    // Predicated region
    $region18: #{tpu_custom_call.1} parent=1 // pred_check
      _
    $region19: #{tpu_custom_call.1} parent=1 // pred_check_branch
      %50 = sbr.rel (0) target = $region21
    $region20: #{tpu_custom_call.1} parent=1 // pred_region
      _
    $region21: #{tpu_custom_call.1} parent=1 // pred_fallthru
      _
    // Predicated region
    $region22: #{tpu_custom_call.1} parent=1 // pred_check
      _
    $region23: #{tpu_custom_call.1} parent=1 // pred_check_branch
      %52 = sbr.rel (0) target = $region25
    $region24: #{tpu_custom_call.1} parent=1 // pred_region
      %54 = dma.done [#allocation3], 128
    $region25: #{tpu_custom_call.1} parent=1 // pred_fallthru
      _
    // Predicated region
    $region26: #{tpu_custom_call.1} parent=1 // pred_check
      _
    $region27: #{tpu_custom_call.1} parent=1 // pred_check_branch
      %56 = sbr.rel (0) target = $region29
    $region28: #{tpu_custom_call.1} parent=1 // pred_region
      %58 = dma.done [#allocation5], 128
    $region29: #{tpu_custom_call.1} parent=1 // pred_fallthru
      _
    // Predicated region
    $region30: #{tpu_custom_call.1} parent=1 // pred_check
      _
    $region31: #{tpu_custom_call.1} parent=1 // pred_check_branch
      %60 = sbr.rel (0) target = $region33
    $region32: #{tpu_custom_call.1} parent=1 // pred_region
      %62 = dma.done [#allocation5], 1024
    $region33: #{tpu_custom_call.1} parent=1 // pred_fallthru
      _
    %v63 = vld [vmem:[%s0] sm:$0xff]
    %v64 = vld [vmem:[#allocation2] sm:$0xff]
    %v65 = vld [vmem:[#allocation4] sm:$0xff]
    %v66 = vld [vmem:[#allocation6] sm:$0xff]
    %v67 = vld [vmem:[#allocation6 + $0x8] sm:$0xff]
    %v68 = vld [vmem:[#allocation6 + $0x10] sm:$0xff]
    %v69 = vld [vmem:[#allocation6 + $0x18] sm:$0xff]
    %v70 = vld [vmem:[#allocation6 + $0x20] sm:$0xff]
    %v71 = vld [vmem:[#allocation6 + $0x28] sm:$0xff]
    %v72 = vld [vmem:[#allocation6 + $0x30] sm:$0xff]
    %v73 = vld [vmem:[#allocation6 + $0x38] sm:$0xff]
    %v74 = vld [vmem:[%s4] sm:$0xff]
    %vm75 = vcmask 261120
    %v76 = vsel %vm75, %v66, 0.0
    %v77 = vrot.slane %v76, 4
    %v78 = vadd.f32 %v76, %v77
    %v79 = vrot.slane %v78, 2
    %v80 = vadd.f32 %v78, %v79
    %v81 = vrot.slane %v80, 1
    %v82 = vadd.f32 %v80, %v81
    %v83 = vsel %vm75, %v67, 0.0
    %v84 = vrot.slane %v83, 4
    %v85 = vadd.f32 %v83, %v84
    %v86 = vrot.slane %v85, 2
    %v87 = vadd.f32 %v85, %v86
    %v88 = vrot.slane %v87, 1
    %v89 = vadd.f32 %v87, %v88
    %v90 = vsel %vm75, %v68, 0.0
    %v91 = vrot.slane %v90, 4
    %v92 = vadd.f32 %v90, %v91
    %v93 = vrot.slane %v92, 2
    %v94 = vadd.f32 %v92, %v93
    %v95 = vrot.slane %v94, 1
    %v96 = vadd.f32 %v94, %v95
    %v97 = vsel %vm75, %v69, 0.0
    %v98 = vrot.slane %v97, 4
    %v99 = vadd.f32 %v97, %v98
    %v100 = vrot.slane %v99, 2
    %v101 = vadd.f32 %v99, %v100
    %v102 = vrot.slane %v101, 1
    %v103 = vadd.f32 %v101, %v102
    %v104 = vsel %vm75, %v70, 0.0
    %v105 = vrot.slane %v104, 4
    %v106 = vadd.f32 %v104, %v105
    %v107 = vrot.slane %v106, 2
    %v108 = vadd.f32 %v106, %v107
    %v109 = vrot.slane %v108, 1
    %v110 = vadd.f32 %v108, %v109
    %v111 = vsel %vm75, %v71, 0.0
    %v112 = vrot.slane %v111, 4
    %v113 = vadd.f32 %v111, %v112
    %v114 = vrot.slane %v113, 2
    %v115 = vadd.f32 %v113, %v114
    %v116 = vrot.slane %v115, 1
    %v117 = vadd.f32 %v115, %v116
    %v118 = vsel %vm75, %v72, 0.0
    %v119 = vrot.slane %v118, 4
    %v120 = vadd.f32 %v118, %v119
    %v121 = vrot.slane %v120, 2
    %v122 = vadd.f32 %v120, %v121
    %v123 = vrot.slane %v122, 1
    %v124 = vadd.f32 %v122, %v123
    %v125 = vsel %vm75, %v73, 0.0
    %v126 = vrot.slane %v125, 4
    %v127 = vadd.f32 %v125, %v126
    %v128 = vrot.slane %v127, 2
    %v129 = vadd.f32 %v127, %v128
    %v130 = vrot.slane %v129, 1
    %v131 = vadd.f32 %v129, %v130
    %v132 = vmul.f32 %v63, %v64
    %v134 = vrot.slane %v65, 1
    %v135 = vrot.slane %v65, 2
    %v136 = vrot.slane %v65, 3
    %v137 = vrot.slane %v65, 4
    %v138 = vrot.slane %v65, 5
    %v139 = vrot.slane %v65, 6
    %v140 = vrot.slane %v65, 7
    %v149 = vmul.f32 %v82, %v65
    %v150 = vmul.f32 %v89, %v134
    %v151 = vmul.f32 %v96, %v135
    %v152 = vmul.f32 %v103, %v136
    %v153 = vmul.f32 %v110, %v137
    %v154 = vmul.f32 %v117, %v138
    %v155 = vmul.f32 %v124, %v139
    %v156 = vmul.f32 %v131, %v140
    %158 = vset.pattern.permute.xlu0 0
    %159 = vperm.xlu0 %158, %v74
    %v160 = vpop.permute.xlu0 %159
    %v161 = vrot.slane %v160, 1
    %v162 = vrot.slane %v160, 2
    %v163 = vrot.slane %v160, 3
    %v164 = vrot.slane %v160, 4
    %v165 = vrot.slane %v160, 5
    %v166 = vrot.slane %v160, 6
    %v167 = vrot.slane %v160, 7
    %v176 = vmul.f32 %v149, %v160
    %v177 = vmul.f32 %v150, %v161
    %v178 = vmul.f32 %v151, %v162
    %v179 = vmul.f32 %v152, %v163
    %v180 = vmul.f32 %v153, %v164
    %v181 = vmul.f32 %v154, %v165
    %v182 = vmul.f32 %v155, %v166
    %v183 = vmul.f32 %v156, %v167
    %v192 = vrot.slane %v177, 7
    %vm193 = vcmask 1041409
    %v194 = vsel %vm193, %v192, %v176
    %v195 = vrot.slane %v178, 6
    %vm196 = vcmask 1042434
    %v197 = vsel %vm196, %v195, %v194
    %v198 = vrot.slane %v179, 5
    %vm199 = vcmask 1043459
    %v200 = vsel %vm199, %v198, %v197
    %v201 = vrot.slane %v180, 4
    %vm202 = vcmask 1044484
    %v203 = vsel %vm202, %v201, %v200
    %v204 = vrot.slane %v181, 3
    %vm205 = vcmask 1045509
    %v206 = vsel %vm205, %v204, %v203
    %v207 = vrot.slane %v182, 2
    %vm208 = vcmask 1046534
    %v209 = vsel %vm208, %v207, %v206
    %v210 = vrot.slane %v183, 1
    %vm211 = vcmask 1047559
    %v212 = vsel %vm211, %v210, %v209
    %v214 = vadd.f32 %v132, %v212
    %v215 = vsel %vm75, %v214, 0.0
    %216 = vadd.xlane.f32.xlu0 %v215
    %v217 = vpop.xlane.xlu0 %216
    %vm218 = vcmask 7168
    %219 = vst.msk [vmem:[%s5] sm:$0xff] %vm218, %v217
    // Predicated region
    $region34: #{tpu_custom_call.1} parent=1 // pred_check
      _
    $region35: #{tpu_custom_call.1} parent=1 // pred_check_branch
      %221 = sbr.rel (0) target = $region37
    $region36: #{tpu_custom_call.1} parent=1 // pred_region
      _
    $region37: #{tpu_custom_call.1} parent=1 // pred_fallthru
      _
    // Predicated region
    $region38: #{tpu_custom_call.1} parent=1 // pred_check
      _
    $region39: #{tpu_custom_call.1} parent=1 // pred_check_branch
      %223 = sbr.rel (0) target = $region41
    $region40: #{tpu_custom_call.1} parent=1 // pred_region
      _
    $region41: #{tpu_custom_call.1} parent=1 // pred_fallthru
      _
    %224 = vsyncpa [#allocation3], 1
    %225 = vsyncpa [#allocation5], 1

</llo_original>
